<compile_context>
chip_gen: v7x
topology: tpu7x:2x2x1
jax: 0.10.0
libtpu: 0.0.40
codegen_flags: <defaults>
</compile_context>

<pallas_src>
import math

import jax
import jax.numpy as jnp
from jax.experimental import pallas as pl
from jax.experimental.pallas import tpu as pltpu


# -----------------------------------------------------------------------------
# General (i, j, k)-tiled Pallas matmul with an f32 accumulator in VMEM.
# -----------------------------------------------------------------------------
def _matmul_kernel(a_ref, b_ref, o_ref, acc_ref):
    @pl.when(pl.program_id(2) == 0)
    def _():
        acc_ref[...] = jnp.zeros_like(acc_ref)

    acc_ref[...] += jnp.dot(
        a_ref[...], b_ref[...], preferred_element_type=jnp.float32
    )

    @pl.when(pl.program_id(2) == pl.num_programs(2) - 1)
    def _():
        o_ref[...] = acc_ref[...].astype(o_ref.dtype)


def _pick_tile(dim, target, align):
    """Largest tile <= target that is a multiple of `align` and divides `dim`.

    Falls back to the full dimension (a full-extent block is always legal,
    regardless of the (8, 128) alignment rule)."""
    if dim <= target or dim % align != 0:
        return dim
    t = (target // align) * align
    while t >= align:
        if dim % t == 0:
            return t
        t -= align
    return dim


def pallas_matmul(a, b, *, compute_dtype=jnp.bfloat16,
                  tm_target=512, tn_target=512, tk_target=512):
    """out = a @ b.  MXU inputs in `compute_dtype`, f32 accumulation, f32 out.

    With the contraction tiled (tk), the resident VMEM set is bounded by the
    tile targets only (~<10 MiB at 512^2 f32), so the same constants are safe
    on v5e / v6e (128 MiB VMEM) and v7x (64 MiB VMEM, 2 TensorCores).
    """
    M, K = a.shape
    K2, N = b.shape
    assert K == K2, f"inner dims mismatch: {a.shape} @ {b.shape}"

    # bf16 MXU inputs: native MXU rate + half the HBM traffic on the dominant
    # (adj) stream.  Accumulation stays f32 (preferred_element_type above).
    a = a.astype(compute_dtype)
    b = b.astype(compute_dtype)

    tm = _pick_tile(M, tm_target, 8)     # 2nd-to-last dims: multiple of 8
    tk = _pick_tile(K, tk_target, 128)   # last dim of A / 2nd-to-last of B
    tn = _pick_tile(N, tn_target, 128)   # last dim of B and of the output

    grid = (M // tm, N // tn, K // tk)

    return pl.pallas_call(
        _matmul_kernel,
        out_shape=jax.ShapeDtypeStruct((M, N), jnp.float32),
        grid_spec=pltpu.PrefetchScalarGridSpec(
            num_scalar_prefetch=0,
            grid=grid,
            in_specs=[
                pl.BlockSpec((tm, tk), lambda i, j, k: (i, k)),
                pl.BlockSpec((tk, tn), lambda i, j, k: (k, j)),
            ],
            out_specs=pl.BlockSpec((tm, tn), lambda i, j, k: (i, j)),
            scratch_shapes=[pltpu.VMEM((tm, tn), jnp.float32)],
        ),
        compiler_params=pltpu.CompilerParams(
            # Row/col axes are independent -> shard across both TCs on v7x.
            # Only the contraction axis must stay sequential (accumulator).
            dimension_semantics=("parallel", "parallel", "arbitrary"),
        ),
    )(a, b)


# -----------------------------------------------------------------------------
# GalaLayer in JAX: deterministic parameter init mirroring reset_parameters()
#   stdv = 1/sqrt(out_features); weight ~ U(-stdv, stdv); bias ~ U(-stdv, stdv)
# (the xavier init in __init__ is immediately overwritten by reset_parameters.)
# -----------------------------------------------------------------------------
class GalaLayer:
    def __init__(self, in_features, out_features, bias=False, *,
                 key, compute_dtype=jnp.bfloat16):
        self.in_features = in_features
        self.out_features = out_features
        self.compute_dtype = compute_dtype
        stdv = 1.0 / math.sqrt(out_features)
        kw, kb = jax.random.split(key)
        self.weight = jax.random.uniform(
            kw, (in_features, out_features), jnp.float32, minval=-stdv, maxval=stdv
        )
        if bias:
            self.bias = jax.random.uniform(
                kb, (out_features,), jnp.float32, minval=-stdv, maxval=stdv
            )
        else:
            self.bias = None

    def __call__(self, x, adj, multi=False, num=2, compute_dtype=None):
        cd = self.compute_dtype if compute_dtype is None else compute_dtype

        # x @ W is negligible FLOPs -> keep it in f32 for precision.
        support = pallas_matmul(x, self.weight, compute_dtype=jnp.float32)

        if multi:
            # adj^num @ support == adj @ (adj @ ... @ (adj @ support))
            # (same math as the torch loop that builds adj^num; just reassociated)
            output = support
            for _ in range(num):
                output = pallas_matmul(adj, output, compute_dtype=cd)
        else:
            output = pallas_matmul(adj, support, compute_dtype=cd)

        if self.bias is not None:
            output = output + self.bias
        return output


# -----------------------------------------------------------------------------
if __name__ == "__main__":
    key = jax.random.PRNGKey(0)
    k_layer, k_x, k_adj = jax.random.split(key, 3)

    N, in_features, out_features = 64, 16, 32

    layer = GalaLayer(in_features, out_features, bias=False, key=k_layer)

    x = jax.random.normal(k_x, (N, in_features), jnp.float32)
    adj_raw = jax.random.uniform(k_adj, (N, N), jnp.float32)
    adj = (adj_raw + adj_raw.T) * 0.5  # symmetric dense adjacency

    HI = jax.lax.Precision.HIGHEST
    support_ref = jnp.dot(x, layer.weight, precision=HI)
    ref = jnp.dot(adj, support_ref, precision=HI)

    # 1) f32 MXU path: tight tolerance against the high-precision reference.
    out_f32 = jax.block_until_ready(layer(x, adj, compute_dtype=jnp.float32))
    assert out_f32.shape == (N, out_features)
    assert jnp.allclose(out_f32, ref, atol=1e-3, rtol=1e-3), "f32 path mismatch"

    # 2) Default path (bf16 MXU inputs, f32 accumulation): relaxed tolerance.
    out_bf16 = jax.block_until_ready(layer(x, adj))
    assert jnp.allclose(out_bf16, ref, atol=5e-2, rtol=5e-2), "bf16 path mismatch"

    # 3) multi=True path: adj^2 @ (x @ W), computed via reassociation.
    ref_multi = jnp.dot(jnp.dot(adj, adj, precision=HI), support_ref, precision=HI)
    out_multi_f32 = jax.block_until_ready(
        layer(x, adj, multi=True, num=2, compute_dtype=jnp.float32))
    assert jnp.allclose(out_multi_f32, ref_multi, atol=1e-2, rtol=1e-3), \
        "multi f32 path mismatch"
    out_multi_bf16 = jax.block_until_ready(layer(x, adj, multi=True, num=2))
    # bf16 inputs + two hops -> tolerance scaled to output magnitude (~1e2).
    assert jnp.allclose(out_multi_bf16, ref_multi, atol=1.0, rtol=5e-2), \
        "multi bf16 path mismatch"

    # 4) bias=True path (same weight key -> same weight as `layer`).
    layer_b = GalaLayer(in_features, out_features, bias=True, key=k_layer)
    out_b = jax.block_until_ready(layer_b(x, adj, compute_dtype=jnp.float32))
    assert jnp.allclose(out_b, ref + layer_b.bias, atol=1e-3, rtol=1e-3), \
        "bias path mismatch"

    print("KERNEL_OK")
</pallas_src>

<mosaic_0001>
module attributes {stable_mosaic.version = 11 : i64} {
  func.func @_matmul_kernel(%arg0: i32, %arg1: i32, %arg2: i32, %arg3: memref<64x16xf32, #tpu.memory_space<vmem>>, %arg4: memref<16x32xf32, #tpu.memory_space<vmem>>, %arg5: memref<64x32xf32, #tpu.memory_space<vmem>>, %arg6: memref<64x32xf32, #tpu.memory_space<vmem>>) attributes {dimension_semantics = [#tpu.dimension_semantics<parallel>, #tpu.dimension_semantics<parallel>, #tpu.dimension_semantics<arbitrary>], iteration_bounds = array<i64: 1, 1, 1>, scalar_prefetch = 0 : i64, scratch_operands = 1 : i64, tpu.core_type = #tpu.core_type<tc>, window_params = [{transform_indices = @transform_0, window_bounds = array<i64: 64, 16>}, {transform_indices = @transform_1, window_bounds = array<i64: 16, 32>}, {transform_indices = @transform_2, window_bounds = array<i64: 64, 32>}]} {
    %c0_i32 = arith.constant 0 : i32
    %0 = arith.cmpi eq, %arg2, %c0_i32 : i32
    %1 = arith.extui %0 : i1 to i32
    %c0_i32_0 = arith.constant 0 : i32
    %2 = arith.cmpi ne, %1, %c0_i32_0 : i32
    scf.if %2 {
      %cst_10 = arith.constant 0.000000e+00 : f32
      %12 = vector.broadcast %cst_10 : f32 to vector<64x32xf32>
      %c0_11 = arith.constant 0 : index
      %c0_12 = arith.constant 0 : index
      %13 = vector.load %arg6[%c0_11, %c0_12] : memref<64x32xf32, #tpu.memory_space<vmem>>, vector<64x32xf32>
      tpu.vector_store %arg6[%c0_11, %c0_12], %12 {strides = array<i32>} : memref<64x32xf32, #tpu.memory_space<vmem>>, vector<64x32xf32>,
    } else {
    }
    %c0 = arith.constant 0 : index
    %c0_1 = arith.constant 0 : index
    %3 = vector.load %arg6[%c0, %c0_1] : memref<64x32xf32, #tpu.memory_space<vmem>>, vector<64x32xf32>
    %c0_2 = arith.constant 0 : index
    %c0_3 = arith.constant 0 : index
    %4 = vector.load %arg3[%c0_2, %c0_3] : memref<64x16xf32, #tpu.memory_space<vmem>>, vector<64x16xf32>
    %c0_4 = arith.constant 0 : index
    %c0_5 = arith.constant 0 : index
    %5 = vector.load %arg4[%c0_4, %c0_5] : memref<16x32xf32, #tpu.memory_space<vmem>>, vector<16x32xf32>
    %cst = arith.constant dense<0.000000e+00> : vector<64x32xf32>
    %6 = tpu.matmul %4, %5, %cst {dimension_numbers = #tpu.dot_dimension_numbers<[1], [0], [0], [1], [0, 0, 1, 1], [], []>} : vector<64x16xf32>, vector<16x32xf32>, vector<64x32xf32> -> vector<64x32xf32>
    %7 = arith.addf %3, %6 : vector<64x32xf32>
    %c0_6 = arith.constant 0 : index
    %c0_7 = arith.constant 0 : index
    %8 = vector.load %arg6[%c0_6, %c0_7] : memref<64x32xf32, #tpu.memory_space<vmem>>, vector<64x32xf32>
    tpu.vector_store %arg6[%c0_6, %c0_7], %7 {strides = array<i32>} : memref<64x32xf32, #tpu.memory_space<vmem>>, vector<64x32xf32>,
    %c0_i32_8 = arith.constant 0 : i32
    %9 = arith.cmpi eq, %arg2, %c0_i32_8 : i32
    %10 = arith.extui %9 : i1 to i32
    %c0_i32_9 = arith.constant 0 : i32
    %11 = arith.cmpi ne, %10, %c0_i32_9 : i32
    scf.if %11 {
      %c0_10 = arith.constant 0 : index
      %c0_11 = arith.constant 0 : index
      %12 = vector.load %arg6[%c0_10, %c0_11] : memref<64x32xf32, #tpu.memory_space<vmem>>, vector<64x32xf32>
      %c0_12 = arith.constant 0 : index
      %c0_13 = arith.constant 0 : index
      %13 = vector.load %arg5[%c0_12, %c0_13] : memref<64x32xf32, #tpu.memory_space<vmem>>, vector<64x32xf32>
      tpu.vector_store %arg5[%c0_12, %c0_13], %12 {strides = array<i32>} : memref<64x32xf32, #tpu.memory_space<vmem>>, vector<64x32xf32>,
    } else {
    }
    return
  }
  func.func @transform_0(%arg0: i32, %arg1: i32, %arg2: i32) -> (i32, i32) {
    %c0_i32 = arith.constant 0 : i32
    return %arg0, %arg2 : i32, i32
  }
  func.func @transform_1(%arg0: i32, %arg1: i32, %arg2: i32) -> (i32, i32) {
    %c0_i32 = arith.constant 0 : i32
    return %arg2, %arg1 : i32, i32
  }
  func.func @transform_2(%arg0: i32, %arg1: i32, %arg2: i32) -> (i32, i32) {
    %c0_i32 = arith.constant 0 : i32
    return %arg0, %arg1 : i32, i32
  }
}

</mosaic_0001>

<llo_original>
// kernel: tpu_custom_call.1
$region0: #{tpu_custom_call.1}
  #allocation0 [shape = 'u32[]', space=smem, size = 0x4, offset = 0x4, fixed_abs, tag = 'smem constant byte address 0x4 - core index']
  #allocation1 [shape = 'u32[144,128]{1,0:T(1,128)}', space=vmem, size = 0x12000, scoped, tag = 'internal scratch']
  #allocation2 [shape = 'f32[64,32]{1,0:T(8,128)}', space=vmem, size = 0x8000, scoped, tag = 'scratch operand']
  %s0 = inlined_call_operand.vmem [shape: f32[64,16], index: 0, kind: input, shape index: {}]
  %s1 = inlined_call_operand.vmem [shape: f32[16,32], index: 1, kind: input, shape index: {}]
  %s2 = inlined_call_operand.vmem [shape: f32[64,32], index: 2, kind: output, shape index: {}]
  %s3 = sld [smem:[#allocation0]]
  $region26: #{tpu_custom_call.1} parent=0
    _
  %s5 = ssub.s32 1, %s3
  %s6 = scalar_select 0, %s5, %s3
  // Predicated region
  $region2: #{tpu_custom_call.1} parent=0 // pred_check
    _
  $region3: #{tpu_custom_call.1} parent=0 // pred_check_branch
    %8 = sbr.rel (0) target = $region5
  $region4: #{tpu_custom_call.1} parent=0 // pred_region
    _
  $region5: #{tpu_custom_call.1} parent=0 // pred_fallthru
    _
  // Predicated region
  $region6: #{tpu_custom_call.1} parent=0 // pred_check
    _
  $region7: #{tpu_custom_call.1} parent=0 // pred_check_branch
    %10 = sbr.rel (0) target = $region9
  $region8: #{tpu_custom_call.1} parent=0 // pred_region
    _
  $region9: #{tpu_custom_call.1} parent=0 // pred_fallthru
    _
  %p11 = scmp.eq.s32.totalorder 0, 0
  // Predicated region
  $region10: #{tpu_custom_call.1} parent=0 // pred_check
    %p12 = pneg %p11
  $region11: #{tpu_custom_call.1} parent=0 // pred_check_branch
    %14 = sbr.rel (%p12) target = $region13
  $region12: #{tpu_custom_call.1} parent=0 // pred_region
    %vm15 = vcmask 261120
    %16 = vst.msk [vmem:[#allocation2] sm:$0xff] %vm15, 0.0
    %17 = vst.msk [vmem:[#allocation2 + $0x8] sm:$0xff] %vm15, 0.0
    %18 = vst.msk [vmem:[#allocation2 + $0x10] sm:$0xff] %vm15, 0.0
    %19 = vst.msk [vmem:[#allocation2 + $0x18] sm:$0xff] %vm15, 0.0
    %20 = vst.msk [vmem:[#allocation2 + $0x20] sm:$0xff] %vm15, 0.0
    %21 = vst.msk [vmem:[#allocation2 + $0x28] sm:$0xff] %vm15, 0.0
    %22 = vst.msk [vmem:[#allocation2 + $0x30] sm:$0xff] %vm15, 0.0
    %23 = vst.msk [vmem:[#allocation2 + $0x38] sm:$0xff] %vm15, 0.0
  $region13: #{tpu_custom_call.1} parent=0 // pred_fallthru
    _
  %v24 = vld [vmem:[#allocation2] sm:$0xff]
  %v25 = vld [vmem:[#allocation2 + $0x8] sm:$0xff]
  %v26 = vld [vmem:[#allocation2 + $0x10] sm:$0xff]
  %v27 = vld [vmem:[#allocation2 + $0x18] sm:$0xff]
  %v28 = vld [vmem:[#allocation2 + $0x20] sm:$0xff]
  %v29 = vld [vmem:[#allocation2 + $0x28] sm:$0xff]
  %v30 = vld [vmem:[#allocation2 + $0x30] sm:$0xff]
  %v31 = vld [vmem:[#allocation2 + $0x38] sm:$0xff]
  %v32 = vld [vmem:[%s0] sm:$0xff]
  %v33 = vld [vmem:[%s0 + $0x8] sm:$0xff]
  %v34 = vld [vmem:[%s0 + $0x10] sm:$0xff]
  %v35 = vld [vmem:[%s0 + $0x18] sm:$0xff]
  %v36 = vld [vmem:[%s0 + $0x20] sm:$0xff]
  %v37 = vld [vmem:[%s0 + $0x28] sm:$0xff]
  %v38 = vld [vmem:[%s0 + $0x30] sm:$0xff]
  %v39 = vld [vmem:[%s0 + $0x38] sm:$0xff]
  %v40 = vld [vmem:[%s1] sm:$0xff]
  %v41 = vld [vmem:[%s1 + $0x8] sm:$0xff]
  %vm42 = vcmask 130048
  %v44 = vsel %vm42, %v32, 0
  %v47 = vsel %vm42, %v33, 0
  %v50 = vsel %vm42, %v34, 0
  %v53 = vsel %vm42, %v35, 0
  %v56 = vsel %vm42, %v36, 0
  %v59 = vsel %vm42, %v37, 0
  %v62 = vsel %vm42, %v38, 0
  %v65 = vsel %vm42, %v39, 0
  %67 = vmatprep.subr.mxu0 0.0
  %68 = vmatpush1.msra.mxu0 %v40
  %69 = vmatprep.subr.mxu0 0.0
  %70 = vmatpush1.msra.mxu0 %v41
  %71 = vmatprep.subr.mxu0 0.0
  %72 = vmatpush1.msra.mxu0 0.0
  %73 = vmatprep.subr.mxu0 0.0
  %74 = vmatpush1.msra.mxu0 0.0
  %75 = vmatprep.subr.mxu0 0.0
  %76 = vmatpush1.msra.mxu0 0.0
  %77 = vmatprep.subr.mxu0 0.0
  %78 = vmatpush1.msra.mxu0 0.0
  %79 = vmatprep.subr.mxu0 0.0
  %80 = vmatpush1.msra.mxu0 0.0
  %81 = vmatprep.subr.mxu0 0.0
  %82 = vmatpush1.msra.mxu0 0.0
  %83 = vmatprep.subr.mxu0 0.0
  %84 = vmatpush1.msra.mxu0 0.0
  %85 = vmatprep.subr.mxu0 0.0
  %86 = vmatpush1.msra.mxu0 0.0
  %87 = vmatprep.subr.mxu0 0.0
  %88 = vmatpush1.msra.mxu0 0.0
  %89 = vmatprep.subr.mxu0 0.0
  %90 = vmatpush1.msra.mxu0 0.0
  %91 = vmatprep.subr.mxu0 0.0
  %92 = vmatpush1.msra.mxu0 0.0
  %93 = vmatprep.subr.mxu0 0.0
  %94 = vmatpush1.msra.mxu0 0.0
  %95 = vmatprep.subr.mxu0 0.0
  %96 = vmatpush1.msra.mxu0 0.0
  %97 = vmatprep.subr.mxu0 0.0
  %98 = vmatpush1.msra.mxu0 0.0
  %99 = vmatprep.subr.mxu0 0.0
  %100 = vmatpush1.msra.mxu0 0.0
  %101 = vmatprep.subr.mxu0 0.0
  %102 = vmatpush1.msra.mxu0 0.0
  %103 = vmatprep.subr.mxu0 0.0
  %104 = vmatpush1.msra.mxu0 0.0
  %105 = vmatprep.subr.mxu0 0.0
  %106 = vmatpush1.msra.mxu0 0.0
  %107 = vmatprep.subr.mxu0 0.0
  %108 = vmatpush1.msra.mxu0 0.0
  %109 = vmatprep.subr.mxu0 0.0
  %110 = vmatpush1.msra.mxu0 0.0
  %111 = vmatprep.subr.mxu0 0.0
  %112 = vmatpush1.msra.mxu0 0.0
  %113 = vmatprep.subr.mxu0 0.0
  %114 = vmatpush1.msra.mxu0 0.0
  %115 = vmatprep.subr.mxu0 0.0
  %116 = vmatpush1.msra.mxu0 0.0
  %117 = vmatprep.subr.mxu0 0.0
  %118 = vmatpush1.msra.mxu0 0.0
  %119 = vmatprep.subr.mxu0 0.0
  %120 = vmatpush1.msra.mxu0 0.0
  %121 = vmatprep.subr.mxu0 0.0
  %122 = vmatpush1.msra.mxu0 0.0
  %123 = vmatprep.subr.mxu0 0.0
  %124 = vmatpush1.msra.mxu0 0.0
  %125 = vmatprep.subr.mxu0 0.0
  %126 = vmatpush1.msra.mxu0 0.0
  %127 = vmatprep.subr.mxu0 0.0
  %128 = vmatpush1.msra.mxu0 0.0
  %129 = vmatprep.subr.mxu0 0.0
  %130 = vmatpush1.msra.mxu0 0.0
  %131 = vmatprep.mubr.f32.mxu0 0.0
  %132 = vmatmul.mubr.f32.gmra.mrb[0].mxu0 %v44
  %v133 = vpop.f32.mrb[0].mxu0
  %v134 = vadd.f32 0.0, %v133
  %v135 = vpop.f32.mrb[0].mxu0
  %136 = vmatprep.mubr.f32.mxu0 0.0
  %137 = vmatmul.mubr.f32.gmra.mrb[0].mxu0 %v47
  %v138 = vpop.f32.mrb[0].mxu0
  %v139 = vadd.f32 0.0, %v138
  %v140 = vpop.f32.mrb[0].mxu0
  %141 = vmatprep.mubr.f32.mxu0 0.0
  %142 = vmatmul.mubr.f32.gmra.mrb[0].mxu0 %v50
  %v143 = vpop.f32.mrb[0].mxu0
  %v144 = vadd.f32 0.0, %v143
  %v145 = vpop.f32.mrb[0].mxu0
  %146 = vmatprep.mubr.f32.mxu0 0.0
  %147 = vmatmul.mubr.f32.gmra.mrb[0].mxu0 %v53
  %v148 = vpop.f32.mrb[0].mxu0
  %v149 = vadd.f32 0.0, %v148
  %v150 = vpop.f32.mrb[0].mxu0
  %151 = vmatprep.mubr.f32.mxu0 0.0
  %152 = vmatmul.mubr.f32.gmra.mrb[0].mxu0 %v56
  %v153 = vpop.f32.mrb[0].mxu0
  %v154 = vadd.f32 0.0, %v153
  %v155 = vpop.f32.mrb[0].mxu0
  %156 = vmatprep.mubr.f32.mxu0 0.0
  %157 = vmatmul.mubr.f32.gmra.mrb[0].mxu0 %v59
  %v158 = vpop.f32.mrb[0].mxu0
  %v159 = vadd.f32 0.0, %v158
  %v160 = vpop.f32.mrb[0].mxu0
  %161 = vmatprep.mubr.f32.mxu0 0.0
  %162 = vmatmul.mubr.f32.gmra.mrb[0].mxu0 %v62
  %v163 = vpop.f32.mrb[0].mxu0
  %v164 = vadd.f32 0.0, %v163
  %v165 = vpop.f32.mrb[0].mxu0
  %166 = vmatprep.mubr.f32.mxu0 0.0
  %167 = vmatmul.mubr.f32.gmra.mrb[0].mxu0 %v65
  %v168 = vpop.f32.mrb[0].mxu0
  %v169 = vadd.f32 0.0, %v168
  %v170 = vpop.f32.mrb[0].mxu0
  %171 = vdwg.mxu0
  %v172 = vadd.f32 %v24, %v134
  %v173 = vadd.f32 %v25, %v139
  %v174 = vadd.f32 %v26, %v144
  %v175 = vadd.f32 %v27, %v149
  %v176 = vadd.f32 %v28, %v154
  %v177 = vadd.f32 %v29, %v159
  %v178 = vadd.f32 %v30, %v164
  %v179 = vadd.f32 %v31, %v169
  %vm180 = vcmask 261120
  %181 = vst.msk [vmem:[#allocation2] sm:$0xff] %vm180, %v172
  %182 = vst.msk [vmem:[#allocation2 + $0x8] sm:$0xff] %vm180, %v173
  %183 = vst.msk [vmem:[#allocation2 + $0x10] sm:$0xff] %vm180, %v174
  %184 = vst.msk [vmem:[#allocation2 + $0x18] sm:$0xff] %vm180, %v175
  %185 = vst.msk [vmem:[#allocation2 + $0x20] sm:$0xff] %vm180, %v176
  %186 = vst.msk [vmem:[#allocation2 + $0x28] sm:$0xff] %vm180, %v177
  %187 = vst.msk [vmem:[#allocation2 + $0x30] sm:$0xff] %vm180, %v178
  %188 = vst.msk [vmem:[#allocation2 + $0x38] sm:$0xff] %vm180, %v179
  // Predicated region
  $region14: #{tpu_custom_call.1} parent=0 // pred_check
    %p189 = pneg %p11
  $region15: #{tpu_custom_call.1} parent=0 // pred_check_branch
    %191 = sbr.rel (%p189) target = $region17
  $region16: #{tpu_custom_call.1} parent=0 // pred_region
    %v192 = vld [vmem:[#allocation2] sm:$0xff]
    %v193 = vld [vmem:[#allocation2 + $0x8] sm:$0xff]
    %v194 = vld [vmem:[#allocation2 + $0x10] sm:$0xff]
    %v195 = vld [vmem:[#allocation2 + $0x18] sm:$0xff]
    %v196 = vld [vmem:[#allocation2 + $0x20] sm:$0xff]
    %v197 = vld [vmem:[#allocation2 + $0x28] sm:$0xff]
    %v198 = vld [vmem:[#allocation2 + $0x30] sm:$0xff]
    %v199 = vld [vmem:[#allocation2 + $0x38] sm:$0xff]
    %200 = vst.msk [vmem:[%s2] sm:$0xff] %vm180, %v192
    %201 = vst.msk [vmem:[%s2 + $0x8] sm:$0xff] %vm180, %v193
    %202 = vst.msk [vmem:[%s2 + $0x10] sm:$0xff] %vm180, %v194
    %203 = vst.msk [vmem:[%s2 + $0x18] sm:$0xff] %vm180, %v195
    %204 = vst.msk [vmem:[%s2 + $0x20] sm:$0xff] %vm180, %v196
    %205 = vst.msk [vmem:[%s2 + $0x28] sm:$0xff] %vm180, %v197
    %206 = vst.msk [vmem:[%s2 + $0x30] sm:$0xff] %vm180, %v198
    %207 = vst.msk [vmem:[%s2 + $0x38] sm:$0xff] %vm180, %v199
  $region17: #{tpu_custom_call.1} parent=0 // pred_fallthru
    _
  // Predicated region
  $region18: #{tpu_custom_call.1} parent=0 // pred_check
    _
  $region19: #{tpu_custom_call.1} parent=0 // pred_check_branch
    %209 = sbr.rel (0) target = $region21
  $region20: #{tpu_custom_call.1} parent=0 // pred_region
    _
  $region21: #{tpu_custom_call.1} parent=0 // pred_fallthru
    _
  // Predicated region
  $region22: #{tpu_custom_call.1} parent=0 // pred_check
    _
  $region23: #{tpu_custom_call.1} parent=0 // pred_check_branch
    %211 = sbr.rel (0) target = $region25
  $region24: #{tpu_custom_call.1} parent=0 // pred_region
    _
  $region25: #{tpu_custom_call.1} parent=0 // pred_fallthru
    _

</llo_original>
